<compile_context>
chip_gen: v6e
topology: v6e:2x2x1
jax: 0.10.0
libtpu: 0.0.40
codegen_flags: <defaults>
</compile_context>

<pallas_src>
import functools

import jax
import jax.numpy as jnp
from jax.experimental import pallas as pl
from jax.experimental.pallas import tpu as pltpu


def _round_up(n, m):
    return (n + m - 1) // m * m


def mlp_kernel(x_ref, w1_ref, b1_ref, w2_ref, b2_ref, o_ref):
    # First linear: [tb, in_p] @ [in_p, out_p] -> f32 accumulate, bias + ReLU in f32.
    h = jnp.dot(x_ref[...], w1_ref[...], preferred_element_type=jnp.float32)
    h = jnp.maximum(h + b1_ref[...], 0.0)
    # Second linear: cast the activation back to the MXU dtype, accumulate in f32.
    y = jnp.dot(h.astype(w2_ref.dtype), w2_ref[...],
                preferred_element_type=jnp.float32)
    o_ref[...] = (y + b2_ref[...]).astype(o_ref.dtype)


@functools.partial(jax.jit, static_argnames=("tb", "compute_dtype"))
def mlp_forward(x, w1, b1, w2, b2, *, tb=256, compute_dtype=jnp.bfloat16):
    """x: [B, in_nc]; w1: [in_nc, out_nc]; b1: [1, out_nc];
    w2: [out_nc, out_nc]; b2: [1, out_nc] -> [B, out_nc] (x.dtype)."""
    B, in_nc = x.shape
    out_nc = w2.shape[1]
    out_dtype = x.dtype

    # Lane-dense / tile-aligned padded sizes.
    in_p = _round_up(in_nc, 128)
    out_p = _round_up(out_nc, 128)
    b_p = _round_up(B, tb)

    # Zero-pad and cast matmul operands to the MXU compute dtype once, here.
    # Zero padding is exact: padded K rows/cols contribute 0, padded bias is 0,
    # ReLU(0) = 0, and padded batch rows / output lanes are sliced off below.
    xp = jnp.pad(x.astype(compute_dtype), ((0, b_p - B), (0, in_p - in_nc)))
    w1p = jnp.pad(w1.astype(compute_dtype), ((0, in_p - in_nc), (0, out_p - out_nc)))
    w2p = jnp.pad(w2.astype(compute_dtype), ((0, out_p - out_nc), (0, out_p - out_nc)))
    b1p = jnp.pad(b1.astype(jnp.float32), ((0, 0), (0, out_p - out_nc)))
    b2p = jnp.pad(b2.astype(jnp.float32), ((0, 0), (0, out_p - out_nc)))

    grid = (b_p // tb,)

    # Advisory cost estimate for XLA's scheduler.
    flops = 2 * b_p * (in_p * out_p + out_p * out_p)
    bytes_accessed = (xp.size * xp.dtype.itemsize
                      + w1p.size * w1p.dtype.itemsize
                      + w2p.size * w2p.dtype.itemsize
                      + b1p.size * 4 + b2p.size * 4
                      + b_p * out_p * jnp.dtype(out_dtype).itemsize)
    cost = pl.CostEstimate(flops=flops, transcendentals=0,
                           bytes_accessed=bytes_accessed)

    # VMEM budget: single-buffered resident weights/biases + double-buffered
    # x tile and output tile + f32 intermediates, with 2x headroom. Cap at
    # 64 MiB so the limit is valid on v7x as well as v5e/v6e.
    c_bytes = jnp.dtype(compute_dtype).itemsize
    o_bytes = jnp.dtype(out_dtype).itemsize
    resident = (in_p * out_p + out_p * out_p) * c_bytes + 2 * out_p * 4
    streaming = 2 * (tb * in_p * c_bytes + tb * out_p * o_bytes)
    intermediates = 3 * tb * out_p * 4
    vmem_limit = int(min(max(2 * (resident + streaming + intermediates),
                             32 * 1024 * 1024),
                         64 * 1024 * 1024))

    out_padded = pl.pallas_call(
        mlp_kernel,
        out_shape=jax.ShapeDtypeStruct((b_p, out_p), out_dtype),
        grid_spec=pltpu.PrefetchScalarGridSpec(
            num_scalar_prefetch=0,
            grid=grid,
            in_specs=[
                # Streaming activation tile: double-buffered (default).
                pl.BlockSpec((tb, in_p), lambda i: (i, 0)),
                # Grid-invariant weights/biases: resident, single-buffered.
                pl.BlockSpec((in_p, out_p), lambda i: (0, 0),
                             pipeline_mode=pl.Buffered(1)),
                pl.BlockSpec((1, out_p), lambda i: (0, 0),
                             pipeline_mode=pl.Buffered(1)),
                pl.BlockSpec((out_p, out_p), lambda i: (0, 0),
                             pipeline_mode=pl.Buffered(1)),
                pl.BlockSpec((1, out_p), lambda i: (0, 0),
                             pipeline_mode=pl.Buffered(1)),
            ],
            out_specs=pl.BlockSpec((tb, out_p), lambda i: (i, 0)),
        ),
        compiler_params=pltpu.CompilerParams(
            dimension_semantics=("parallel",),
            vmem_limit_bytes=vmem_limit,
        ),
        cost_estimate=cost,
    )(xp, w1p, b1p, w2p, b2p)

    # Strip batch / lane padding.
    return out_padded[:B, :out_nc]


def init_mlp_params(key, input_nc, output_nc, dtype=jnp.float32):
    """Deterministic init mirroring PyTorch nn.Linear defaults:
    weight, bias ~ U(-1/sqrt(fan_in), 1/sqrt(fan_in))."""
    k1, k2, k3, k4 = jax.random.split(key, 4)
    bound1 = 1.0 / jnp.sqrt(jnp.float32(input_nc))
    bound2 = 1.0 / jnp.sqrt(jnp.float32(output_nc))
    # PyTorch stores weight as (out, in); we transpose to (in, out) for x @ W.
    w1 = jax.random.uniform(k1, (output_nc, input_nc), dtype, -bound1, bound1).T
    b1 = jax.random.uniform(k2, (1, output_nc), dtype, -bound1, bound1)
    w2 = jax.random.uniform(k3, (output_nc, output_nc), dtype, -bound2, bound2).T
    b2 = jax.random.uniform(k4, (1, output_nc), dtype, -bound2, bound2)
    return w1, b1, w2, b2


if __name__ == "__main__":
    input_nc, output_nc = 32, 64
    batch = 16

    key = jax.random.PRNGKey(0)
    kx, kp = jax.random.split(key)
    x = jax.random.normal(kx, (batch, input_nc), jnp.float32)
    w1, b1, w2, b2 = init_mlp_params(kp, input_nc, output_nc)

    out = mlp_forward(x, w1, b1, w2, b2)
    out = jax.block_until_ready(out)

    # Reference with matching precision pattern (bf16 matmul inputs, f32 acc).
    xb, w1b, w2b = (a.astype(jnp.bfloat16) for a in (x, w1, w2))
    h = jnp.maximum(jnp.dot(xb, w1b, preferred_element_type=jnp.float32) + b1, 0.0)
    ref = jnp.dot(h.astype(jnp.bfloat16), w2b,
                  preferred_element_type=jnp.float32) + b2

    assert out.shape == (batch, output_nc)
    assert jnp.allclose(out, ref.astype(out.dtype), atol=1e-2, rtol=1e-2)

    print("KERNEL_OK")
</pallas_src>

<mosaic_0001>
module attributes {stable_mosaic.version = 11 : i64} {
  func.func @mlp_kernel(%arg0: i32, %arg1: memref<256x128xbf16, #tpu.memory_space<vmem>>, %arg2: memref<128x128xbf16, #tpu.memory_space<vmem>>, %arg3: memref<1x128xf32, #tpu.memory_space<vmem>>, %arg4: memref<128x128xbf16, #tpu.memory_space<vmem>>, %arg5: memref<1x128xf32, #tpu.memory_space<vmem>>, %arg6: memref<256x128xf32, #tpu.memory_space<vmem>>) attributes {dimension_semantics = [#tpu.dimension_semantics<parallel>], iteration_bounds = array<i64: 1>, scalar_prefetch = 0 : i64, scratch_operands = 0 : i64, tpu.core_type = #tpu.core_type<tc>, window_params = [{transform_indices = @transform_0, window_bounds = array<i64: 256, 128>}, {pipeline_mode = #tpu.pipeline_mode<synchronous>, transform_indices = @transform_1, window_bounds = array<i64: 128, 128>}, {pipeline_mode = #tpu.pipeline_mode<synchronous>, transform_indices = @transform_2, window_bounds = array<i64: 1, 128>}, {pipeline_mode = #tpu.pipeline_mode<synchronous>, transform_indices = @transform_3, window_bounds = array<i64: 128, 128>}, {pipeline_mode = #tpu.pipeline_mode<synchronous>, transform_indices = @transform_4, window_bounds = array<i64: 1, 128>}, {transform_indices = @transform_5, window_bounds = array<i64: 256, 128>}]} {
    %c0 = arith.constant 0 : index
    %c0_0 = arith.constant 0 : index
    %0 = vector.load %arg1[%c0, %c0_0] : memref<256x128xbf16, #tpu.memory_space<vmem>>, vector<256x128xbf16>
    %c0_1 = arith.constant 0 : index
    %c0_2 = arith.constant 0 : index
    %1 = vector.load %arg2[%c0_1, %c0_2] : memref<128x128xbf16, #tpu.memory_space<vmem>>, vector<128x128xbf16>
    %cst = arith.constant dense<0.000000e+00> : vector<256x128xf32>
    %2 = tpu.matmul %0, %1, %cst {dimension_numbers = #tpu.dot_dimension_numbers<[1], [0], [0], [1], [0, 0, 1, 1], [], []>} : vector<256x128xbf16>, vector<128x128xbf16>, vector<256x128xf32> -> vector<256x128xf32>
    %c0_3 = arith.constant 0 : index
    %c0_4 = arith.constant 0 : index
    %3 = vector.load %arg3[%c0_3, %c0_4] : memref<1x128xf32, #tpu.memory_space<vmem>>, vector<1x128xf32>
    %4 = vector.broadcast %3 : vector<1x128xf32> to vector<256x128xf32>
    %5 = arith.addf %2, %4 : vector<256x128xf32>
    %cst_5 = arith.constant 0.000000e+00 : f32
    %6 = vector.broadcast %cst_5 : f32 to vector<256x128xf32>
    %7 = arith.maximumf %5, %6 : vector<256x128xf32>
    %8 = arith.truncf %7 : vector<256x128xf32> to vector<256x128xbf16>
    %c0_6 = arith.constant 0 : index
    %c0_7 = arith.constant 0 : index
    %9 = vector.load %arg4[%c0_6, %c0_7] : memref<128x128xbf16, #tpu.memory_space<vmem>>, vector<128x128xbf16>
    %cst_8 = arith.constant dense<0.000000e+00> : vector<256x128xf32>
    %10 = tpu.matmul %8, %9, %cst_8 {dimension_numbers = #tpu.dot_dimension_numbers<[1], [0], [0], [1], [0, 0, 1, 1], [], []>} : vector<256x128xbf16>, vector<128x128xbf16>, vector<256x128xf32> -> vector<256x128xf32>
    %c0_9 = arith.constant 0 : index
    %c0_10 = arith.constant 0 : index
    %11 = vector.load %arg5[%c0_9, %c0_10] : memref<1x128xf32, #tpu.memory_space<vmem>>, vector<1x128xf32>
    %12 = vector.broadcast %11 : vector<1x128xf32> to vector<256x128xf32>
    %13 = arith.addf %10, %12 : vector<256x128xf32>
    %c0_11 = arith.constant 0 : index
    %c0_12 = arith.constant 0 : index
    %14 = vector.load %arg6[%c0_11, %c0_12] : memref<256x128xf32, #tpu.memory_space<vmem>>, vector<256x128xf32>
    tpu.vector_store %arg6[%c0_11, %c0_12], %13 {strides = array<i32>} : memref<256x128xf32, #tpu.memory_space<vmem>>, vector<256x128xf32>,
    return
  }
  func.func @transform_0(%arg0: i32) -> (i32, i32) {
    %c0_i32 = arith.constant 0 : i32
    %c0_i32_0 = arith.constant 0 : i32
    return %arg0, %c0_i32 : i32, i32
  }
  func.func @transform_1(%arg0: i32) -> (i32, i32) {
    %c0_i32 = arith.constant 0 : i32
    %c0_i32_0 = arith.constant 0 : i32
    %c0_i32_1 = arith.constant 0 : i32
    return %c0_i32, %c0_i32_0 : i32, i32
  }
  func.func @transform_2(%arg0: i32) -> (i32, i32) {
    %c0_i32 = arith.constant 0 : i32
    %c0_i32_0 = arith.constant 0 : i32
    %c0_i32_1 = arith.constant 0 : i32
    return %c0_i32, %c0_i32_0 : i32, i32
  }
  func.func @transform_3(%arg0: i32) -> (i32, i32) {
    %c0_i32 = arith.constant 0 : i32
    %c0_i32_0 = arith.constant 0 : i32
    %c0_i32_1 = arith.constant 0 : i32
    return %c0_i32, %c0_i32_0 : i32, i32
  }
  func.func @transform_4(%arg0: i32) -> (i32, i32) {
    %c0_i32 = arith.constant 0 : i32
    %c0_i32_0 = arith.constant 0 : i32
    %c0_i32_1 = arith.constant 0 : i32
    return %c0_i32, %c0_i32_0 : i32, i32
  }
  func.func @transform_5(%arg0: i32) -> (i32, i32) {
    %c0_i32 = arith.constant 0 : i32
    %c0_i32_0 = arith.constant 0 : i32
    return %arg0, %c0_i32 : i32, i32
  }
}

</mosaic_0001>

<llo_original>
// kernel: mlp_forward.1
$region0: #{mlp_forward.1}
  #allocation0 [shape = 'u32[]', space=smem, size = 0x4, offset = 0x4, fixed_abs, tag = 'smem constant byte address 0x4 - core index']
  #allocation1 [shape = 'u32[144,128]{1,0:T(1,128)}', space=vmem, size = 0x12000, scoped, tag = 'internal scratch']
  %s0 = inlined_call_operand.vmem [shape: bf16[256,128], index: 0, kind: input, shape index: {}]
  %s1 = inlined_call_operand.vmem [shape: bf16[128,128], index: 1, kind: input, shape index: {}]
  %s2 = inlined_call_operand.vmem [shape: f32[1,128], index: 2, kind: input, shape index: {}]
  %s3 = inlined_call_operand.vmem [shape: bf16[128,128], index: 3, kind: input, shape index: {}]
  %s4 = inlined_call_operand.vmem [shape: f32[1,128], index: 4, kind: input, shape index: {}]
  %s5 = inlined_call_operand.vmem [shape: f32[256,128], index: 5, kind: output, shape index: {}]
  %s6 = sld [smem:[#allocation0]]
  $region30: #{mlp_forward.1} parent=0
    _
  %s8 = ssub.s32 1, %s6
  %s9 = scalar_select 0, %s8, %s6
  // Predicated region
  $region2: #{mlp_forward.1} parent=0 // pred_check
    _
  $region3: #{mlp_forward.1} parent=0 // pred_check_branch
    %11 = sbr.rel (0) target = $region5
  $region4: #{mlp_forward.1} parent=0 // pred_region
    _
  $region5: #{mlp_forward.1} parent=0 // pred_fallthru
    _
  // Predicated region
  $region6: #{mlp_forward.1} parent=0 // pred_check
    _
  $region7: #{mlp_forward.1} parent=0 // pred_check_branch
    %13 = sbr.rel (0) target = $region9
  $region8: #{mlp_forward.1} parent=0 // pred_region
    _
  $region9: #{mlp_forward.1} parent=0 // pred_fallthru
    _
  // Predicated region
  $region10: #{mlp_forward.1} parent=0 // pred_check
    _
  $region11: #{mlp_forward.1} parent=0 // pred_check_branch
    %15 = sbr.rel (0) target = $region13
  $region12: #{mlp_forward.1} parent=0 // pred_region
    _
  $region13: #{mlp_forward.1} parent=0 // pred_fallthru
    _
  // Predicated region
  $region14: #{mlp_forward.1} parent=0 // pred_check
    _
  $region15: #{mlp_forward.1} parent=0 // pred_check_branch
    %17 = sbr.rel (0) target = $region17
  $region16: #{mlp_forward.1} parent=0 // pred_region
    _
  $region17: #{mlp_forward.1} parent=0 // pred_fallthru
    _
  // Predicated region
  $region18: #{mlp_forward.1} parent=0 // pred_check
    _
  $region19: #{mlp_forward.1} parent=0 // pred_check_branch
    %19 = sbr.rel (0) target = $region21
  $region20: #{mlp_forward.1} parent=0 // pred_region
    _
  $region21: #{mlp_forward.1} parent=0 // pred_fallthru
    _
  %v21 = vld [vmem:[%s0] sm:$0xf]
  %v22 = vld [vmem:[%s0 + $0x4] sm:$0xf]
  %v23 = vld [vmem:[%s0 + $0x8] sm:$0xf]
  %v24 = vld [vmem:[%s0 + $0xc] sm:$0xf]
  %v25 = vld [vmem:[%s0 + $0x10] sm:$0xf]
  %v26 = vld [vmem:[%s0 + $0x14] sm:$0xf]
  %v27 = vld [vmem:[%s0 + $0x18] sm:$0xf]
  %v28 = vld [vmem:[%s0 + $0x1c] sm:$0xf]
  %v29 = vld [vmem:[%s0 + $0x20] sm:$0xf]
  %v30 = vld [vmem:[%s0 + $0x24] sm:$0xf]
  %v31 = vld [vmem:[%s0 + $0x28] sm:$0xf]
  %v32 = vld [vmem:[%s0 + $0x2c] sm:$0xf]
  %v33 = vld [vmem:[%s0 + $0x30] sm:$0xf]
  %v34 = vld [vmem:[%s0 + $0x34] sm:$0xf]
  %v35 = vld [vmem:[%s0 + $0x38] sm:$0xf]
  %v36 = vld [vmem:[%s0 + $0x3c] sm:$0xf]
  %v37 = vld [vmem:[%s0 + $0x40] sm:$0xf]
  %v38 = vld [vmem:[%s0 + $0x44] sm:$0xf]
  %v39 = vld [vmem:[%s0 + $0x48] sm:$0xf]
  %v40 = vld [vmem:[%s0 + $0x4c] sm:$0xf]
  %v41 = vld [vmem:[%s0 + $0x50] sm:$0xf]
  %v42 = vld [vmem:[%s0 + $0x54] sm:$0xf]
  %v43 = vld [vmem:[%s0 + $0x58] sm:$0xf]
  %v44 = vld [vmem:[%s0 + $0x5c] sm:$0xf]
  %v45 = vld [vmem:[%s0 + $0x60] sm:$0xf]
  %v46 = vld [vmem:[%s0 + $0x64] sm:$0xf]
  %v47 = vld [vmem:[%s0 + $0x68] sm:$0xf]
  %v48 = vld [vmem:[%s0 + $0x6c] sm:$0xf]
  %v49 = vld [vmem:[%s0 + $0x70] sm:$0xf]
  %v50 = vld [vmem:[%s0 + $0x74] sm:$0xf]
  %v51 = vld [vmem:[%s0 + $0x78] sm:$0xf]
  %v52 = vld [vmem:[%s0 + $0x7c] sm:$0xf]
  %v53 = vld [vmem:[%s1] sm:$0xf]
  %v54 = vld [vmem:[%s1 + $0x4] sm:$0xf]
  %v55 = vld [vmem:[%s1 + $0x8] sm:$0xf]
  %v56 = vld [vmem:[%s1 + $0xc] sm:$0xf]
  %v57 = vld [vmem:[%s1 + $0x10] sm:$0xf]
  %v58 = vld [vmem:[%s1 + $0x14] sm:$0xf]
  %v59 = vld [vmem:[%s1 + $0x18] sm:$0xf]
  %v60 = vld [vmem:[%s1 + $0x1c] sm:$0xf]
  %v61 = vld [vmem:[%s1 + $0x20] sm:$0xf]
  %v62 = vld [vmem:[%s1 + $0x24] sm:$0xf]
  %v63 = vld [vmem:[%s1 + $0x28] sm:$0xf]
  %v64 = vld [vmem:[%s1 + $0x2c] sm:$0xf]
  %v65 = vld [vmem:[%s1 + $0x30] sm:$0xf]
  %v66 = vld [vmem:[%s1 + $0x34] sm:$0xf]
  %v67 = vld [vmem:[%s1 + $0x38] sm:$0xf]
  %v68 = vld [vmem:[%s1 + $0x3c] sm:$0xf]
  %v69 = vld [vmem:[%s2] sm:$0x1]
  %v71 = vlaneseq
  %v72 = vshrl.u32 %v71, 7
  %v73 = vsub.s32 0, %v72
  %v74 = vrot.slane %v69, %v73
  %v108 = vunpack.c.l.b16 %v21
  %v109 = vunpack.c.l.b16 %v22
  %v110 = vunpack.c.l.b16 %v23
  %v111 = vunpack.c.l.b16 %v24
  %v112 = vunpack.c.l.b16 %v25
  %v113 = vunpack.c.l.b16 %v26
  %v114 = vunpack.c.l.b16 %v27
  %v115 = vunpack.c.l.b16 %v28
  %v116 = vunpack.c.l.b16 %v29
  %v117 = vunpack.c.l.b16 %v30
  %v118 = vunpack.c.l.b16 %v31
  %v119 = vunpack.c.l.b16 %v32
  %v120 = vunpack.c.l.b16 %v33
  %v121 = vunpack.c.l.b16 %v34
  %v122 = vunpack.c.l.b16 %v35
  %v123 = vunpack.c.l.b16 %v36
  %v124 = vunpack.c.l.b16 %v37
  %v125 = vunpack.c.l.b16 %v38
  %v126 = vunpack.c.l.b16 %v39
  %v127 = vunpack.c.l.b16 %v40
  %v128 = vunpack.c.l.b16 %v41
  %v129 = vunpack.c.l.b16 %v42
  %v130 = vunpack.c.l.b16 %v43
  %v131 = vunpack.c.l.b16 %v44
  %v132 = vunpack.c.l.b16 %v45
  %v133 = vunpack.c.l.b16 %v46
  %v134 = vunpack.c.l.b16 %v47
  %v135 = vunpack.c.l.b16 %v48
  %v136 = vunpack.c.l.b16 %v49
  %v137 = vunpack.c.l.b16 %v50
  %v138 = vunpack.c.l.b16 %v51
  %v139 = vunpack.c.l.b16 %v52
  %v140 = vpack.c.b16 %v109, %v108
  %v141 = vpack.c.b16 %v111, %v110
  %v142 = vpack.c.b16 %v113, %v112
  %v143 = vpack.c.b16 %v115, %v114
  %v144 = vpack.c.b16 %v117, %v116
  %v145 = vpack.c.b16 %v119, %v118
  %v146 = vpack.c.b16 %v121, %v120
  %v147 = vpack.c.b16 %v123, %v122
  %v148 = vpack.c.b16 %v125, %v124
  %v149 = vpack.c.b16 %v127, %v126
  %v150 = vpack.c.b16 %v129, %v128
  %v151 = vpack.c.b16 %v131, %v130
  %v152 = vpack.c.b16 %v133, %v132
  %v153 = vpack.c.b16 %v135, %v134
  %v154 = vpack.c.b16 %v137, %v136
  %v155 = vpack.c.b16 %v139, %v138
  %v188 = vunpack.c.l.b16 %v53
  %v189 = vunpack.c.l.b16 %v54
  %v190 = vunpack.c.l.b16 %v55
  %v191 = vunpack.c.l.b16 %v56
  %v192 = vunpack.c.l.b16 %v57
  %v193 = vunpack.c.l.b16 %v58
  %v194 = vunpack.c.l.b16 %v59
  %v195 = vunpack.c.l.b16 %v60
  %v196 = vunpack.c.l.b16 %v61
  %v197 = vunpack.c.l.b16 %v62
  %v198 = vunpack.c.l.b16 %v63
  %v199 = vunpack.c.l.b16 %v64
  %v200 = vunpack.c.l.b16 %v65
  %v201 = vunpack.c.l.b16 %v66
  %v202 = vunpack.c.l.b16 %v67
  %v203 = vunpack.c.l.b16 %v68
  %v204 = vpack.c.b16 %v189, %v188
  %v205 = vpack.c.b16 %v191, %v190
  %v206 = vpack.c.b16 %v193, %v192
  %v207 = vpack.c.b16 %v195, %v194
  %v208 = vpack.c.b16 %v197, %v196
  %v209 = vpack.c.b16 %v199, %v198
  %v210 = vpack.c.b16 %v201, %v200
  %v211 = vpack.c.b16 %v203, %v202
  %220 = vmatprep.subr.bf16.mxu0 0
  %221 = vmatpush1.bf16.msra.mxu0 %v211
  %222 = vmatprep.subr.bf16.mxu0 0
  %223 = vmatpush1.bf16.msra.mxu0 %v210
  %224 = vmatprep.subr.bf16.mxu0 0
  %225 = vmatpush1.bf16.msra.mxu0 %v209
  %226 = vmatprep.subr.bf16.mxu0 0
  %227 = vmatpush1.bf16.msra.mxu0 %v208
  %228 = vmatprep.subr.bf16.mxu0 0
  %229 = vmatpush1.bf16.msra.mxu0 %v207
  %230 = vmatprep.subr.bf16.mxu0 0
  %231 = vmatpush1.bf16.msra.mxu0 %v206
  %232 = vmatprep.subr.bf16.mxu0 0
  %233 = vmatpush1.bf16.msra.mxu0 %v205
  %234 = vmatprep.subr.bf16.mxu0 0
  %235 = vmatpush1.bf16.msra.mxu0 %v204
  %236 = vmatprep.subr.bf16.mxu0 0
  %237 = vmatpush2.bf16.msra.mxu0 0
  %238 = vmatprep.subr.bf16.mxu0 0
  %239 = vmatpush2.bf16.msra.mxu0 0
  %240 = vmatprep.subr.bf16.mxu0 0
  %241 = vmatpush2.bf16.msra.mxu0 0
  %242 = vmatprep.subr.bf16.mxu0 0
  %243 = vmatpush2.bf16.msra.mxu0 0
  %244 = vmatprep.subr.bf16.mxu0 0
  %245 = vmatpush2.bf16.msra.mxu0 0
  %246 = vmatprep.subr.bf16.mxu0 0
  %247 = vmatpush2.bf16.msra.mxu0 0
  %248 = vmatprep.subr.bf16.mxu0 0
  %249 = vmatpush2.bf16.msra.mxu0 0
  %250 = vmatprep.subr.bf16.mxu0 0
  %251 = vmatpush2.bf16.msra.mxu0 0
  %252 = vmatprep.mubr.bf16.mxu0 0
  %253 = vmatmul.mubr.bf16.gmra.mxu0 %v140
  %v254 = vpop.f32.mrf.mxu0
  %v255 = vadd.f32 %v74, %v254
  %v256 = vpop.f32.mrf.mxu0
  %v257 = vpop.f32.mrf.mxu0
  %v258 = vadd.f32 %v74, %v257
  %v259 = vpop.f32.mrf.mxu0
  %260 = vmatprep.mubr.bf16.mxu0 0
  %261 = vmatmul.mubr.bf16.gmra.mxu0 %v141
  %v262 = vpop.f32.mrf.mxu0
  %v263 = vadd.f32 %v74, %v262
  %v264 = vpop.f32.mrf.mxu0
  %v265 = vpop.f32.mrf.mxu0
  %v266 = vadd.f32 %v74, %v265
  %v267 = vpop.f32.mrf.mxu0
  %268 = vmatprep.mubr.bf16.mxu0 0
  %269 = vmatmul.mubr.bf16.gmra.mxu0 %v142
  %v270 = vpop.f32.mrf.mxu0
  %v271 = vadd.f32 %v74, %v270
  %v272 = vpop.f32.mrf.mxu0
  %v273 = vpop.f32.mrf.mxu0
  %v274 = vadd.f32 %v74, %v273
  %v275 = vpop.f32.mrf.mxu0
  %276 = vmatprep.mubr.bf16.mxu0 0
  %277 = vmatmul.mubr.bf16.gmra.mxu0 %v143
  %v278 = vpop.f32.mrf.mxu0
  %v279 = vadd.f32 %v74, %v278
  %v280 = vpop.f32.mrf.mxu0
  %v281 = vpop.f32.mrf.mxu0
  %v282 = vadd.f32 %v74, %v281
  %v283 = vpop.f32.mrf.mxu0
  %284 = vmatprep.mubr.bf16.mxu0 0
  %285 = vmatmul.mubr.bf16.gmra.mxu0 %v144
  %v286 = vpop.f32.mrf.mxu0
  %v287 = vadd.f32 %v74, %v286
  %v288 = vpop.f32.mrf.mxu0
  %v289 = vpop.f32.mrf.mxu0
  %v290 = vadd.f32 %v74, %v289
  %v291 = vpop.f32.mrf.mxu0
  %292 = vmatprep.mubr.bf16.mxu0 0
  %293 = vmatmul.mubr.bf16.gmra.mxu0 %v145
  %v294 = vpop.f32.mrf.mxu0
  %v295 = vadd.f32 %v74, %v294
  %v296 = vpop.f32.mrf.mxu0
  %v297 = vpop.f32.mrf.mxu0
  %v298 = vadd.f32 %v74, %v297
  %v299 = vpop.f32.mrf.mxu0
  %300 = vmatprep.mubr.bf16.mxu0 0
  %301 = vmatmul.mubr.bf16.gmra.mxu0 %v146
  %v302 = vpop.f32.mrf.mxu0
  %v303 = vadd.f32 %v74, %v302
  %v304 = vpop.f32.mrf.mxu0
  %v305 = vpop.f32.mrf.mxu0
  %v306 = vadd.f32 %v74, %v305
  %v307 = vpop.f32.mrf.mxu0
  %308 = vmatprep.mubr.bf16.mxu0 0
  %309 = vmatmul.mubr.bf16.gmra.mxu0 %v147
  %v310 = vpop.f32.mrf.mxu0
  %v311 = vadd.f32 %v74, %v310
  %v312 = vpop.f32.mrf.mxu0
  %v313 = vpop.f32.mrf.mxu0
  %v314 = vadd.f32 %v74, %v313
  %v315 = vpop.f32.mrf.mxu0
  %316 = vmatprep.mubr.bf16.mxu0 0
  %317 = vmatmul.mubr.bf16.gmra.mxu0 %v148
  %v318 = vpop.f32.mrf.mxu0
  %v319 = vadd.f32 %v74, %v318
  %v320 = vpop.f32.mrf.mxu0
  %v321 = vpop.f32.mrf.mxu0
  %v322 = vadd.f32 %v74, %v321
  %v323 = vpop.f32.mrf.mxu0
  %324 = vmatprep.mubr.bf16.mxu0 0
  %325 = vmatmul.mubr.bf16.gmra.mxu0 %v149
  %v326 = vpop.f32.mrf.mxu0
  %v327 = vadd.f32 %v74, %v326
  %v328 = vpop.f32.mrf.mxu0
  %v329 = vpop.f32.mrf.mxu0
  %v330 = vadd.f32 %v74, %v329
  %v331 = vpop.f32.mrf.mxu0
  %332 = vmatprep.mubr.bf16.mxu0 0
  %333 = vmatmul.mubr.bf16.gmra.mxu0 %v150
  %v334 = vpop.f32.mrf.mxu0
  %v335 = vadd.f32 %v74, %v334
  %v336 = vpop.f32.mrf.mxu0
  %v337 = vpop.f32.mrf.mxu0
  %v338 = vadd.f32 %v74, %v337
  %v339 = vpop.f32.mrf.mxu0
  %340 = vmatprep.mubr.bf16.mxu0 0
  %341 = vmatmul.mubr.bf16.gmra.mxu0 %v151
  %v342 = vpop.f32.mrf.mxu0
  %v343 = vadd.f32 %v74, %v342
  %v344 = vpop.f32.mrf.mxu0
  %v345 = vpop.f32.mrf.mxu0
  %v346 = vadd.f32 %v74, %v345
  %v347 = vpop.f32.mrf.mxu0
  %348 = vmatprep.mubr.bf16.mxu0 0
  %349 = vmatmul.mubr.bf16.gmra.mxu0 %v152
  %v350 = vpop.f32.mrf.mxu0
  %v351 = vadd.f32 %v74, %v350
  %v352 = vpop.f32.mrf.mxu0
  %v353 = vpop.f32.mrf.mxu0
  %v354 = vadd.f32 %v74, %v353
  %v355 = vpop.f32.mrf.mxu0
  %356 = vmatprep.mubr.bf16.mxu0 0
  %357 = vmatmul.mubr.bf16.gmra.mxu0 %v153
  %v358 = vpop.f32.mrf.mxu0
  %v359 = vadd.f32 %v74, %v358
  %v360 = vpop.f32.mrf.mxu0
  %v361 = vpop.f32.mrf.mxu0
  %v362 = vadd.f32 %v74, %v361
  %v363 = vpop.f32.mrf.mxu0
  %364 = vmatprep.mubr.bf16.mxu0 0
  %365 = vmatmul.mubr.bf16.gmra.mxu0 %v154
  %v366 = vpop.f32.mrf.mxu0
  %v367 = vadd.f32 %v74, %v366
  %v368 = vpop.f32.mrf.mxu0
  %v369 = vpop.f32.mrf.mxu0
  %v370 = vadd.f32 %v74, %v369
  %v371 = vpop.f32.mrf.mxu0
  %372 = vmatprep.mubr.bf16.mxu0 0
  %373 = vmatmul.mubr.bf16.gmra.mxu0 %v155
  %v374 = vpop.f32.mrf.mxu0
  %v375 = vadd.f32 %v74, %v374
  %v376 = vpop.f32.mrf.mxu0
  %v377 = vpop.f32.mrf.mxu0
  %v378 = vadd.f32 %v74, %v377
  %v379 = vpop.f32.mrf.mxu0
  %380 = vdwg.mxu0
  %v381 = vmax.f32 %v255, 0.0
  %v382 = vmax.f32 %v258, 0.0
  %v383 = vmax.f32 %v263, 0.0
  %v384 = vmax.f32 %v266, 0.0
  %v385 = vmax.f32 %v271, 0.0
  %v386 = vmax.f32 %v274, 0.0
  %v387 = vmax.f32 %v279, 0.0
  %v388 = vmax.f32 %v282, 0.0
  %v389 = vmax.f32 %v287, 0.0
  %v390 = vmax.f32 %v290, 0.0
  %v391 = vmax.f32 %v295, 0.0
  %v392 = vmax.f32 %v298, 0.0
  %v393 = vmax.f32 %v303, 0.0
  %v394 = vmax.f32 %v306, 0.0
  %v395 = vmax.f32 %v311, 0.0
  %v396 = vmax.f32 %v314, 0.0
  %v397 = vmax.f32 %v319, 0.0
  %v398 = vmax.f32 %v322, 0.0
  %v399 = vmax.f32 %v327, 0.0
  %v400 = vmax.f32 %v330, 0.0
  %v401 = vmax.f32 %v335, 0.0
  %v402 = vmax.f32 %v338, 0.0
  %v403 = vmax.f32 %v343, 0.0
  %v404 = vmax.f32 %v346, 0.0
  %v405 = vmax.f32 %v351, 0.0
  %v406 = vmax.f32 %v354, 0.0
  %v407 = vmax.f32 %v359, 0.0
  %v408 = vmax.f32 %v362, 0.0
  %v409 = vmax.f32 %v367, 0.0
  %v410 = vmax.f32 %v370, 0.0
  %v411 = vmax.f32 %v375, 0.0
  %v412 = vmax.f32 %v378, 0.0
  %v413 = vpack.c.bf16 %v382, %v381
  %v414 = vpack.c.bf16 %v384, %v383
  %v415 = vpack.c.bf16 %v386, %v385
  %v416 = vpack.c.bf16 %v388, %v387
  %v417 = vpack.c.bf16 %v390, %v389
  %v418 = vpack.c.bf16 %v392, %v391
  %v419 = vpack.c.bf16 %v394, %v393
  %v420 = vpack.c.bf16 %v396, %v395
  %v421 = vpack.c.bf16 %v398, %v397
  %v422 = vpack.c.bf16 %v400, %v399
  %v423 = vpack.c.bf16 %v402, %v401
  %v424 = vpack.c.bf16 %v404, %v403
  %v425 = vpack.c.bf16 %v406, %v405
  %v426 = vpack.c.bf16 %v408, %v407
  %v427 = vpack.c.bf16 %v410, %v409
  %v428 = vpack.c.bf16 %v412, %v411
  %v429 = vld [vmem:[%s3] sm:$0xf]
  %v430 = vld [vmem:[%s3 + $0x4] sm:$0xf]
  %v431 = vld [vmem:[%s3 + $0x8] sm:$0xf]
  %v432 = vld [vmem:[%s3 + $0xc] sm:$0xf]
  %v433 = vld [vmem:[%s3 + $0x10] sm:$0xf]
  %v434 = vld [vmem:[%s3 + $0x14] sm:$0xf]
  %v435 = vld [vmem:[%s3 + $0x18] sm:$0xf]
  %v436 = vld [vmem:[%s3 + $0x1c] sm:$0xf]
  %v437 = vld [vmem:[%s3 + $0x20] sm:$0xf]
  %v438 = vld [vmem:[%s3 + $0x24] sm:$0xf]
  %v439 = vld [vmem:[%s3 + $0x28] sm:$0xf]
  %v440 = vld [vmem:[%s3 + $0x2c] sm:$0xf]
  %v441 = vld [vmem:[%s3 + $0x30] sm:$0xf]
  %v442 = vld [vmem:[%s3 + $0x34] sm:$0xf]
  %v443 = vld [vmem:[%s3 + $0x38] sm:$0xf]
  %v444 = vld [vmem:[%s3 + $0x3c] sm:$0xf]
  %v445 = vld [vmem:[%s4] sm:$0x1]
  %v447 = vlaneseq
  %v448 = vshrl.u32 %v447, 7
  %v449 = vsub.s32 0, %v448
  %v450 = vrot.slane %v445, %v449
  %v468 = vunpack.c.l.b16 %v429
  %v469 = vunpack.c.l.b16 %v430
  %v470 = vunpack.c.l.b16 %v431
  %v471 = vunpack.c.l.b16 %v432
  %v472 = vunpack.c.l.b16 %v433
  %v473 = vunpack.c.l.b16 %v434
  %v474 = vunpack.c.l.b16 %v435
  %v475 = vunpack.c.l.b16 %v436
  %v476 = vunpack.c.l.b16 %v437
  %v477 = vunpack.c.l.b16 %v438
  %v478 = vunpack.c.l.b16 %v439
  %v479 = vunpack.c.l.b16 %v440
  %v480 = vunpack.c.l.b16 %v441
  %v481 = vunpack.c.l.b16 %v442
  %v482 = vunpack.c.l.b16 %v443
  %v483 = vunpack.c.l.b16 %v444
  %v484 = vpack.c.b16 %v469, %v468
  %v485 = vpack.c.b16 %v471, %v470
  %v486 = vpack.c.b16 %v473, %v472
  %v487 = vpack.c.b16 %v475, %v474
  %v488 = vpack.c.b16 %v477, %v476
  %v489 = vpack.c.b16 %v479, %v478
  %v490 = vpack.c.b16 %v481, %v480
  %v491 = vpack.c.b16 %v483, %v482
  %500 = vmatprep.subr.bf16.mxu0 0
  %501 = vmatpush1.bf16.msra.mxu0 %v491
  %502 = vmatprep.subr.bf16.mxu0 0
  %503 = vmatpush1.bf16.msra.mxu0 %v490
  %504 = vmatprep.subr.bf16.mxu0 0
  %505 = vmatpush1.bf16.msra.mxu0 %v489
  %506 = vmatprep.subr.bf16.mxu0 0
  %507 = vmatpush1.bf16.msra.mxu0 %v488
  %508 = vmatprep.subr.bf16.mxu0 0
  %509 = vmatpush1.bf16.msra.mxu0 %v487
  %510 = vmatprep.subr.bf16.mxu0 0
  %511 = vmatpush1.bf16.msra.mxu0 %v486
  %512 = vmatprep.subr.bf16.mxu0 0
  %513 = vmatpush1.bf16.msra.mxu0 %v485
  %514 = vmatprep.subr.bf16.mxu0 0
  %515 = vmatpush1.bf16.msra.mxu0 %v484
  %516 = vmatprep.subr.bf16.mxu0 0
  %517 = vmatpush2.bf16.msra.mxu0 0
  %518 = vmatprep.subr.bf16.mxu0 0
  %519 = vmatpush2.bf16.msra.mxu0 0
  %520 = vmatprep.subr.bf16.mxu0 0
  %521 = vmatpush2.bf16.msra.mxu0 0
  %522 = vmatprep.subr.bf16.mxu0 0
  %523 = vmatpush2.bf16.msra.mxu0 0
  %524 = vmatprep.subr.bf16.mxu0 0
  %525 = vmatpush2.bf16.msra.mxu0 0
  %526 = vmatprep.subr.bf16.mxu0 0
  %527 = vmatpush2.bf16.msra.mxu0 0
  %528 = vmatprep.subr.bf16.mxu0 0
  %529 = vmatpush2.bf16.msra.mxu0 0
  %530 = vmatprep.subr.bf16.mxu0 0
  %531 = vmatpush2.bf16.msra.mxu0 0
  %532 = vmatprep.mubr.bf16.mxu0 0
  %533 = vmatmul.mubr.bf16.gmra.mxu0 %v413
  %v534 = vpop.f32.mrf.mxu0
  %v535 = vadd.f32 %v450, %v534
  %v536 = vpop.f32.mrf.mxu0
  %v537 = vpop.f32.mrf.mxu0
  %v538 = vadd.f32 %v450, %v537
  %v539 = vpop.f32.mrf.mxu0
  %540 = vmatprep.mubr.bf16.mxu0 0
  %541 = vmatmul.mubr.bf16.gmra.mxu0 %v414
  %v542 = vpop.f32.mrf.mxu0
  %v543 = vadd.f32 %v450, %v542
  %v544 = vpop.f32.mrf.mxu0
  %v545 = vpop.f32.mrf.mxu0
  %v546 = vadd.f32 %v450, %v545
  %v547 = vpop.f32.mrf.mxu0
  %548 = vmatprep.mubr.bf16.mxu0 0
  %549 = vmatmul.mubr.bf16.gmra.mxu0 %v415
  %v550 = vpop.f32.mrf.mxu0
  %v551 = vadd.f32 %v450, %v550
  %v552 = vpop.f32.mrf.mxu0
  %v553 = vpop.f32.mrf.mxu0
  %v554 = vadd.f32 %v450, %v553
  %v555 = vpop.f32.mrf.mxu0
  %556 = vmatprep.mubr.bf16.mxu0 0
  %557 = vmatmul.mubr.bf16.gmra.mxu0 %v416
  %v558 = vpop.f32.mrf.mxu0
  %v559 = vadd.f32 %v450, %v558
  %v560 = vpop.f32.mrf.mxu0
  %v561 = vpop.f32.mrf.mxu0
  %v562 = vadd.f32 %v450, %v561
  %v563 = vpop.f32.mrf.mxu0
  %564 = vmatprep.mubr.bf16.mxu0 0
  %565 = vmatmul.mubr.bf16.gmra.mxu0 %v417
  %v566 = vpop.f32.mrf.mxu0
  %v567 = vadd.f32 %v450, %v566
  %v568 = vpop.f32.mrf.mxu0
  %v569 = vpop.f32.mrf.mxu0
  %v570 = vadd.f32 %v450, %v569
  %v571 = vpop.f32.mrf.mxu0
  %572 = vmatprep.mubr.bf16.mxu0 0
  %573 = vmatmul.mubr.bf16.gmra.mxu0 %v418
  %v574 = vpop.f32.mrf.mxu0
  %v575 = vadd.f32 %v450, %v574
  %v576 = vpop.f32.mrf.mxu0
  %v577 = vpop.f32.mrf.mxu0
  %v578 = vadd.f32 %v450, %v577
  %v579 = vpop.f32.mrf.mxu0
  %580 = vmatprep.mubr.bf16.mxu0 0
  %581 = vmatmul.mubr.bf16.gmra.mxu0 %v419
  %v582 = vpop.f32.mrf.mxu0
  %v583 = vadd.f32 %v450, %v582
  %v584 = vpop.f32.mrf.mxu0
  %v585 = vpop.f32.mrf.mxu0
  %v586 = vadd.f32 %v450, %v585
  %v587 = vpop.f32.mrf.mxu0
  %588 = vmatprep.mubr.bf16.mxu0 0
  %589 = vmatmul.mubr.bf16.gmra.mxu0 %v420
  %v590 = vpop.f32.mrf.mxu0
  %v591 = vadd.f32 %v450, %v590
  %v592 = vpop.f32.mrf.mxu0
  %v593 = vpop.f32.mrf.mxu0
  %v594 = vadd.f32 %v450, %v593
  %v595 = vpop.f32.mrf.mxu0
  %596 = vmatprep.mubr.bf16.mxu0 0
  %597 = vmatmul.mubr.bf16.gmra.mxu0 %v421
  %v598 = vpop.f32.mrf.mxu0
  %v599 = vadd.f32 %v450, %v598
  %v600 = vpop.f32.mrf.mxu0
  %v601 = vpop.f32.mrf.mxu0
  %v602 = vadd.f32 %v450, %v601
  %v603 = vpop.f32.mrf.mxu0
  %604 = vmatprep.mubr.bf16.mxu0 0
  %605 = vmatmul.mubr.bf16.gmra.mxu0 %v422
  %v606 = vpop.f32.mrf.mxu0
  %v607 = vadd.f32 %v450, %v606
  %v608 = vpop.f32.mrf.mxu0
  %v609 = vpop.f32.mrf.mxu0
  %v610 = vadd.f32 %v450, %v609
  %v611 = vpop.f32.mrf.mxu0
  %612 = vmatprep.mubr.bf16.mxu0 0
  %613 = vmatmul.mubr.bf16.gmra.mxu0 %v423
  %v614 = vpop.f32.mrf.mxu0
  %v615 = vadd.f32 %v450, %v614
  %v616 = vpop.f32.mrf.mxu0
  %v617 = vpop.f32.mrf.mxu0
  %v618 = vadd.f32 %v450, %v617
  %v619 = vpop.f32.mrf.mxu0
  %620 = vmatprep.mubr.bf16.mxu0 0
  %621 = vmatmul.mubr.bf16.gmra.mxu0 %v424
  %v622 = vpop.f32.mrf.mxu0
  %v623 = vadd.f32 %v450, %v622
  %v624 = vpop.f32.mrf.mxu0
  %v625 = vpop.f32.mrf.mxu0
  %v626 = vadd.f32 %v450, %v625
  %v627 = vpop.f32.mrf.mxu0
  %628 = vmatprep.mubr.bf16.mxu0 0
  %629 = vmatmul.mubr.bf16.gmra.mxu0 %v425
  %v630 = vpop.f32.mrf.mxu0
  %v631 = vadd.f32 %v450, %v630
  %v632 = vpop.f32.mrf.mxu0
  %v633 = vpop.f32.mrf.mxu0
  %v634 = vadd.f32 %v450, %v633
  %v635 = vpop.f32.mrf.mxu0
  %636 = vmatprep.mubr.bf16.mxu0 0
  %637 = vmatmul.mubr.bf16.gmra.mxu0 %v426
  %v638 = vpop.f32.mrf.mxu0
  %v639 = vadd.f32 %v450, %v638
  %v640 = vpop.f32.mrf.mxu0
  %v641 = vpop.f32.mrf.mxu0
  %v642 = vadd.f32 %v450, %v641
  %v643 = vpop.f32.mrf.mxu0
  %644 = vmatprep.mubr.bf16.mxu0 0
  %645 = vmatmul.mubr.bf16.gmra.mxu0 %v427
  %v646 = vpop.f32.mrf.mxu0
  %v647 = vadd.f32 %v450, %v646
  %v648 = vpop.f32.mrf.mxu0
  %v649 = vpop.f32.mrf.mxu0
  %v650 = vadd.f32 %v450, %v649
  %v651 = vpop.f32.mrf.mxu0
  %652 = vmatprep.mubr.bf16.mxu0 0
  %653 = vmatmul.mubr.bf16.gmra.mxu0 %v428
  %v654 = vpop.f32.mrf.mxu0
  %v655 = vadd.f32 %v450, %v654
  %v656 = vpop.f32.mrf.mxu0
  %v657 = vpop.f32.mrf.mxu0
  %v658 = vadd.f32 %v450, %v657
  %v659 = vpop.f32.mrf.mxu0
  %660 = vdwg.mxu0
  %661 = vst [vmem:[%s5] sm:$0xff] %v535
  %662 = vst [vmem:[%s5 + $0x8] sm:$0xff] %v538
  %663 = vst [vmem:[%s5 + $0x10] sm:$0xff] %v543
  %664 = vst [vmem:[%s5 + $0x18] sm:$0xff] %v546
  %665 = vst [vmem:[%s5 + $0x20] sm:$0xff] %v551
  %666 = vst [vmem:[%s5 + $0x28] sm:$0xff] %v554
  %667 = vst [vmem:[%s5 + $0x30] sm:$0xff] %v559
  %668 = vst [vmem:[%s5 + $0x38] sm:$0xff] %v562
  %669 = vst [vmem:[%s5 + $0x40] sm:$0xff] %v567
  %670 = vst [vmem:[%s5 + $0x48] sm:$0xff] %v570
  %671 = vst [vmem:[%s5 + $0x50] sm:$0xff] %v575
  %672 = vst [vmem:[%s5 + $0x58] sm:$0xff] %v578
  %673 = vst [vmem:[%s5 + $0x60] sm:$0xff] %v583
  %674 = vst [vmem:[%s5 + $0x68] sm:$0xff] %v586
  %675 = vst [vmem:[%s5 + $0x70] sm:$0xff] %v591
  %676 = vst [vmem:[%s5 + $0x78] sm:$0xff] %v594
  %677 = vst [vmem:[%s5 + $0x80] sm:$0xff] %v599
  %678 = vst [vmem:[%s5 + $0x88] sm:$0xff] %v602
  %679 = vst [vmem:[%s5 + $0x90] sm:$0xff] %v607
  %680 = vst [vmem:[%s5 + $0x98] sm:$0xff] %v610
  %681 = vst [vmem:[%s5 + $0xa0] sm:$0xff] %v615
  %682 = vst [vmem:[%s5 + $0xa8] sm:$0xff] %v618
  %683 = vst [vmem:[%s5 + $0xb0] sm:$0xff] %v623
  %684 = vst [vmem:[%s5 + $0xb8] sm:$0xff] %v626
  %685 = vst [vmem:[%s5 + $0xc0] sm:$0xff] %v631
  %686 = vst [vmem:[%s5 + $0xc8] sm:$0xff] %v634
  %687 = vst [vmem:[%s5 + $0xd0] sm:$0xff] %v639
  %688 = vst [vmem:[%s5 + $0xd8] sm:$0xff] %v642
  %689 = vst [vmem:[%s5 + $0xe0] sm:$0xff] %v647
  %690 = vst [vmem:[%s5 + $0xe8] sm:$0xff] %v650
  %691 = vst [vmem:[%s5 + $0xf0] sm:$0xff] %v655
  %692 = vst [vmem:[%s5 + $0xf8] sm:$0xff] %v658
  // Predicated region
  $region22: #{mlp_forward.1} parent=0 // pred_check
    _
  $region23: #{mlp_forward.1} parent=0 // pred_check_branch
    %694 = sbr.rel (0) target = $region25
  $region24: #{mlp_forward.1} parent=0 // pred_region
    _
  $region25: #{mlp_forward.1} parent=0 // pred_fallthru
    _
  // Predicated region
  $region26: #{mlp_forward.1} parent=0 // pred_check
    _
  $region27: #{mlp_forward.1} parent=0 // pred_check_branch
    %696 = sbr.rel (0) target = $region29
  $region28: #{mlp_forward.1} parent=0 // pred_region
    _
  $region29: #{mlp_forward.1} parent=0 // pred_fallthru
    _

</llo_original>
